<compile_context>
chip_gen: v7x
topology: tpu7x:2x2x1
jax: 0.10.0
libtpu: 0.0.40
codegen_flags: <defaults>
</compile_context>

<pallas_src>
import jax
import jax.numpy as jnp
from jax.experimental import pallas as pl
from jax.experimental.pallas import tpu as pltpu


def _round16(c):
    return ((c + 15) // 16) * 16


# ----------------------------------------------------------------------------
# Fused kernel: all TemporalBlocks, activations resident in VMEM.
# ----------------------------------------------------------------------------
def _make_fused_kernel(level_meta, kernel_size, seq_len, mask_rows):
    k = kernel_size

    def kernel(x_ref, mask_ref, *refs):
        o_ref = refs[-1]
        wrefs = refs[:-1]

        act = x_ref[...].astype(jnp.float32)     # (Cp0, TB) f32 working copy

        wi = 0
        for dilation, has_ds in level_meta:
            w1 = wrefs[wi][...]
            b1 = wrefs[wi + 1][...]
            w2 = wrefs[wi + 2][...]
            b2 = wrefs[wi + 3][...]
            wi += 4
            if has_ds:
                wd = wrefs[wi][...]
                bd = wrefs[wi + 1][...]
                wi += 2

            shifts = [(k - 1 - j) * dilation for j in range(k)]
            # (1, TB) bf16 causal-mask rows, loaded once per level and reused
            # by both convs of this level.
            mrow = {s: mask_ref[mask_rows[s]:mask_rows[s] + 1, :]
                    for s in set(shifts) if 0 < s < seq_len}

            def im2col(a, _shifts=shifts, _mrow=mrow):
                # Stack the k causally-shifted copies along channels, casting
                # each piece to bf16 BEFORE the concat: (k*C, TB) bf16.
                pieces = []
                for s in _shifts:
                    if s == 0:
                        pieces.append(a.astype(jnp.bfloat16))
                    elif s >= seq_len:
                        pieces.append(jnp.zeros(a.shape, jnp.bfloat16))
                    else:
                        # lane rotate (XLU) + zero the first s steps of every
                        # batch segment (causal left-pad == chomp)
                        pieces.append(
                            pltpu.roll(a, s, axis=1).astype(jnp.bfloat16)
                            * _mrow[s])
                return jnp.concatenate(pieces, axis=0)

            # conv1 -> relu (single MXU matmul, f32 accumulation)
            h = jnp.dot(w1, im2col(act), preferred_element_type=jnp.float32) + b1
            h = jnp.maximum(h, 0.0)
            # conv2 -> relu
            h = jnp.dot(w2, im2col(h), preferred_element_type=jnp.float32) + b2
            h = jnp.maximum(h, 0.0)

            # residual: 1x1 downsample conv or identity
            if has_ds:
                res = jnp.dot(wd, act.astype(jnp.bfloat16),
                              preferred_element_type=jnp.float32) + bd
            else:
                res = act
            act = jnp.maximum(h + res, 0.0)

        o_ref[...] = act.astype(o_ref.dtype)

    return kernel


# ----------------------------------------------------------------------------
# Weight prep: pad channels to multiples of 16, stack taps into
# (Cp_out, k*Cp_in) bf16, biases as (Cp_out, 1) f32.
# ----------------------------------------------------------------------------
def _prep_weights(params, kernel_size):
    k = kernel_size
    cin0 = params[0]["w1"].shape[1]
    cps = [_round16(cin0)] + [_round16(p["w1"].shape[0]) for p in params]

    flat, meta = [], []
    for i, p in enumerate(params):
        cout, cin, _ = p["w1"].shape
        cpi, cpo = cps[i], cps[i + 1]
        dilation = k ** i
        has_ds = "wd" in p

        def stack(w, cpo_, cpi_):
            # column block j of the stacked weight == W[:, :, j] (zero padded)
            buf = jnp.zeros((cpo_, k, cpi_), jnp.float32)
            buf = buf.at[:w.shape[0], :, :w.shape[1]].set(
                jnp.transpose(w, (0, 2, 1)))
            return buf.reshape(cpo_, k * cpi_).astype(jnp.bfloat16)

        def padb(b, cpo_):
            return jnp.zeros((cpo_, 1), jnp.float32).at[:b.shape[0], 0].set(b)

        flat += [stack(p["w1"], cpo, cpi), padb(p["b1"], cpo),
                 stack(p["w2"], cpo, cpo), padb(p["b2"], cpo)]
        if has_ds:
            wd = jnp.zeros((cpo, cpi), jnp.float32).at[:cout, :cin].set(
                p["wd"][:, :, 0])
            flat += [wd.astype(jnp.bfloat16), padb(p["bd"], cpo)]
        meta.append((dilation, has_ds))
    return flat, meta, cps


# ----------------------------------------------------------------------------
# Generation-aware tiling: per-segment lane padding + VMEM-budgeted tile.
# ----------------------------------------------------------------------------
def _choose_tiling(n_batch, seq_len, cps, n_mask_rows, kernel_size):
    """Returns (Lp, b, Nb, vmem_cap, per_lane_bytes).

    A grid block is (C, b*Lp) and always contains whole lane-padded batch
    segments, so pltpu.roll wraparound is confined to the causally-masked
    first lanes of each segment.
    """
    Lp = ((seq_len + 127) // 128) * 128
    cp_max, cp0, cp_last = max(cps), cps[0], cps[-1]
    # rough bytes/lane of the in-kernel working set
    per_lane = (kernel_size * cp_max * 2      # bf16 im2col stack
                + 4 * cp_max * 4              # act / h / res f32 temporaries
                + 2 * 2 * cp0 * 2             # double-buffered bf16 in block
                + 2 * 2 * cp_last * 2         # double-buffered bf16 out block
                + 2 * n_mask_rows * 2)        # double-buffered bf16 masks
    try:
        vmem_cap = pltpu.get_tpu_info().vmem_capacity_bytes
    except Exception:                          # conservative fallback
        vmem_cap = 64 * 1024 * 1024
    budget = int(vmem_cap * 0.35)
    tb_max = max(Lp, (budget // per_lane) // 128 * 128)
    b = max(1, min(n_batch, tb_max // Lp))
    # megacore / 2-TC: make sure the "parallel" grid axis has >= 2 blocks
    if n_batch >= 2 and -(-n_batch // b) < 2:
        b = (n_batch + 1) // 2
    nb = -(-n_batch // b) * b
    return Lp, b, nb, vmem_cap, per_lane


# ----------------------------------------------------------------------------
# Wrapper: pad + fold batch into lanes, build masks, pallas_call, unfold.
# ----------------------------------------------------------------------------
def temporal_conv_net(x, params, *, kernel_size):
    """TemporalConvNet forward. x: (N, C_in, L) -> (N, C_out_last, L)."""
    N, Cin, L = x.shape
    k = kernel_size
    flat_w, meta, cps = _prep_weights(params, kernel_size)
    cp0, cp_last = cps[0], cps[-1]
    c_last = params[-1]["w1"].shape[0]

    # distinct causal shifts needing a mask row (0 < s < L)
    all_shifts = sorted({(k - 1 - j) * d for d, _ in meta for j in range(k)})
    mask_shifts = [s for s in all_shifts if 0 < s < L]
    mask_rows = {s: r for r, s in enumerate(mask_shifts)}
    n_rows = max(16, _round16(len(mask_shifts)))

    Lp, b, Nb, vmem_cap, per_lane = _choose_tiling(N, L, cps, n_rows, k)
    tb = b * Lp
    t_total = Nb * Lp
    grid = (t_total // tb,)
    # roll wraparound is only safe on whole padded segments per block
    assert tb % Lp == 0 and Lp % 128 == 0 and tb % 128 == 0

    # channel-pad to 16, lane-pad each segment to Lp, fold batch into lanes
    xt = jnp.transpose(x.astype(jnp.float32), (1, 0, 2))            # (Cin,N,L)
    xt = jnp.pad(xt, ((0, cp0 - Cin), (0, Nb - N), (0, Lp - L)))
    x_f = xt.reshape(cp0, t_total).astype(jnp.bfloat16)

    # precomputed bf16 causal masks — one block's worth (identical per block)
    pos = jnp.arange(Lp, dtype=jnp.int32)
    mask_seg = jnp.zeros((n_rows, Lp), jnp.bfloat16)
    for s, r in mask_rows.items():
        mask_seg = mask_seg.at[r].set((pos >= s).astype(jnp.bfloat16))
    mask_blk = jnp.tile(mask_seg, (1, b))                           # (rows, tb)

    in_specs = [
        pl.BlockSpec((cp0, tb), lambda t: (0, t)),      # activations (bf16)
        pl.BlockSpec((n_rows, tb), lambda t: (0, 0)),   # causal masks (bf16)
    ] + [pl.BlockSpec(w.shape, lambda t: (0, 0)) for w in flat_w]
    out_specs = pl.BlockSpec((cp_last, tb), lambda t: (0, t))

    # VMEM limit from the estimated working set (+ headroom), capped by HW
    w_bytes = sum(int(w.size) * w.dtype.itemsize for w in flat_w)
    working_set = per_lane * tb + 2 * w_bytes + 2 * int(mask_blk.size) * 2
    vmem_limit = int(min(vmem_cap * 0.85,
                         max(32 * 1024 * 1024, working_set * 2)))

    # advisory cost estimate for the XLA scheduler
    flops = 0
    for i, (dilation, has_ds) in enumerate(meta):
        cpi, cpo = cps[i], cps[i + 1]
        flops += 2 * k * cpi * cpo + 2 * k * cpo * cpo
        if has_ds:
            flops += 2 * cpi * cpo
    flops *= t_total
    bytes_accessed = (int(x_f.size) * 2 + cp_last * t_total * 2
                      + int(mask_blk.size) * 2 + w_bytes)

    kernel = _make_fused_kernel(meta, kernel_size, L, mask_rows)

    out = pl.pallas_call(
        kernel,
        out_shape=jax.ShapeDtypeStruct((cp_last, t_total), jnp.bfloat16),
        grid=grid,
        in_specs=in_specs,
        out_specs=out_specs,
        compiler_params=pltpu.CompilerParams(
            dimension_semantics=("parallel",),
            vmem_limit_bytes=vmem_limit),
        cost_estimate=pl.CostEstimate(
            flops=int(flops), transcendentals=0,
            bytes_accessed=int(bytes_accessed)),
    )(x_f, mask_blk, *flat_w)

    # slice to real channels BEFORE the transpose so it moves fewer bytes
    out = out[:c_last].reshape(c_last, Nb, Lp)[:, :N, :L]
    return jnp.transpose(out, (1, 0, 2)).astype(x.dtype)


# ----------------------------------------------------------------------------
# Deterministic parameter init (mirrors the PyTorch module's shapes/init:
# conv weights ~ N(0, 0.01), biases ~ Conv1d default uniform).
# ----------------------------------------------------------------------------
def init_tcn_params(key, num_inputs, num_channels, kernel_size):
    params = []
    for i, cout in enumerate(num_channels):
        cin = num_inputs if i == 0 else num_channels[i - 1]
        key, kw1, kb1, kw2, kb2, kwd, kbd = jax.random.split(key, 7)
        b1_bound = 1.0 / (cin * kernel_size) ** 0.5
        b2_bound = 1.0 / (cout * kernel_size) ** 0.5
        p = {
            "w1": 0.01 * jax.random.normal(
                kw1, (cout, cin, kernel_size), jnp.float32),
            "b1": jax.random.uniform(
                kb1, (cout,), jnp.float32, -b1_bound, b1_bound),
            "w2": 0.01 * jax.random.normal(
                kw2, (cout, cout, kernel_size), jnp.float32),
            "b2": jax.random.uniform(
                kb2, (cout,), jnp.float32, -b2_bound, b2_bound),
        }
        if cin != cout:  # 1x1 downsample conv
            bd_bound = 1.0 / cin ** 0.5
            p["wd"] = 0.01 * jax.random.normal(kwd, (cout, cin, 1), jnp.float32)
            p["bd"] = jax.random.uniform(
                kbd, (cout,), jnp.float32, -bd_bound, bd_bound)
        params.append(p)
    return params


# ----------------------------------------------------------------------------
# Pure-JAX reference mirroring the kernel math (bf16 matmul operands and bf16
# kernel I/O, f32 accumulation / elementwise) for correctness checking.
# ----------------------------------------------------------------------------
def _tcn_ref(x, params, kernel_size):
    f32 = jnp.float32
    q = lambda a: a.astype(jnp.bfloat16).astype(f32)   # bf16 rounding

    def conv(inp, w, b, dilation):
        kk = w.shape[-1]
        L = inp.shape[-1]
        xq, wq = q(inp), q(w)
        acc = jnp.zeros((inp.shape[0], w.shape[0], L), f32)
        for j in range(kk):
            shift = (kk - 1 - j) * dilation
            xs = xq if shift == 0 else jnp.pad(
                xq, ((0, 0), (0, 0), (shift, 0)))[:, :, :L]
            acc = acc + jnp.einsum("oc,ncl->nol", wq[:, :, j], xs)
        return acc + b[None, :, None]

    out = q(x.astype(f32))            # kernel input is bf16
    for i, p in enumerate(params):
        d = kernel_size ** i
        h = jnp.maximum(conv(out, p["w1"], p["b1"], d), 0.0)
        h = jnp.maximum(conv(h, p["w2"], p["b2"], d), 0.0)
        if "wd" in p:
            res = jnp.einsum("oc,ncl->nol", q(p["wd"][:, :, 0]), q(out)) \
                + p["bd"][None, :, None]
        else:
            res = out
        out = jnp.maximum(h + res, 0.0)
    return q(out)                     # kernel output is bf16


# ----------------------------------------------------------------------------
if __name__ == "__main__":
    key = jax.random.PRNGKey(0)
    k_x, k_p = jax.random.split(key)

    N, C_in, L = 2, 4, 16
    num_channels = [8, 8]       # level 0 has downsample (4 != 8), level 1 not
    kernel_size = 2

    x = jax.random.normal(k_x, (N, C_in, L), jnp.float32)
    params = init_tcn_params(k_p, C_in, num_channels, kernel_size)

    out = temporal_conv_net(x, params, kernel_size=kernel_size)
    out = jax.block_until_ready(out)

    ref = _tcn_ref(x, params, kernel_size)
    assert out.shape == (N, num_channels[-1], L), out.shape
    err = float(jnp.max(jnp.abs(out - ref)))
    assert jnp.allclose(out, ref, atol=1e-2, rtol=1e-2), err

    print("KERNEL_OK")
</pallas_src>

<mosaic_0001>
module attributes {stable_mosaic.version = 11 : i64} {
  func.func @kernel(%arg0: i32, %arg1: memref<16x128xbf16, #tpu.memory_space<vmem>>, %arg2: memref<16x128xbf16, #tpu.memory_space<vmem>>, %arg3: memref<16x32xbf16, #tpu.memory_space<vmem>>, %arg4: memref<16x1xf32, #tpu.memory_space<vmem>>, %arg5: memref<16x32xbf16, #tpu.memory_space<vmem>>, %arg6: memref<16x1xf32, #tpu.memory_space<vmem>>, %arg7: memref<16x16xbf16, #tpu.memory_space<vmem>>, %arg8: memref<16x1xf32, #tpu.memory_space<vmem>>, %arg9: memref<16x32xbf16, #tpu.memory_space<vmem>>, %arg10: memref<16x1xf32, #tpu.memory_space<vmem>>, %arg11: memref<16x32xbf16, #tpu.memory_space<vmem>>, %arg12: memref<16x1xf32, #tpu.memory_space<vmem>>, %arg13: memref<16x128xbf16, #tpu.memory_space<vmem>>) attributes {dimension_semantics = [#tpu.dimension_semantics<parallel>], iteration_bounds = array<i64: 2>, scalar_prefetch = 0 : i64, scratch_operands = 0 : i64, tpu.core_type = #tpu.core_type<tc>, window_params = [{transform_indices = @transform_0, window_bounds = array<i64: 16, 128>}, {pipeline_mode = #tpu.pipeline_mode<synchronous>, transform_indices = @transform_1, window_bounds = array<i64: 16, 128>}, {pipeline_mode = #tpu.pipeline_mode<synchronous>, transform_indices = @transform_2, window_bounds = array<i64: 16, 32>}, {pipeline_mode = #tpu.pipeline_mode<synchronous>, transform_indices = @transform_3, window_bounds = array<i64: 16, 1>}, {pipeline_mode = #tpu.pipeline_mode<synchronous>, transform_indices = @transform_4, window_bounds = array<i64: 16, 32>}, {pipeline_mode = #tpu.pipeline_mode<synchronous>, transform_indices = @transform_5, window_bounds = array<i64: 16, 1>}, {pipeline_mode = #tpu.pipeline_mode<synchronous>, transform_indices = @transform_6, window_bounds = array<i64: 16, 16>}, {pipeline_mode = #tpu.pipeline_mode<synchronous>, transform_indices = @transform_7, window_bounds = array<i64: 16, 1>}, {pipeline_mode = #tpu.pipeline_mode<synchronous>, transform_indices = @transform_8, window_bounds = array<i64: 16, 32>}, {pipeline_mode = #tpu.pipeline_mode<synchronous>, transform_indices = @transform_9, window_bounds = array<i64: 16, 1>}, {pipeline_mode = #tpu.pipeline_mode<synchronous>, transform_indices = @transform_10, window_bounds = array<i64: 16, 32>}, {pipeline_mode = #tpu.pipeline_mode<synchronous>, transform_indices = @transform_11, window_bounds = array<i64: 16, 1>}, {transform_indices = @transform_12, window_bounds = array<i64: 16, 128>}]} {
    %c0 = arith.constant 0 : index
    %c0_0 = arith.constant 0 : index
    %0 = vector.load %arg1[%c0, %c0_0] : memref<16x128xbf16, #tpu.memory_space<vmem>>, vector<16x128xbf16>
    %1 = arith.extf %0 : vector<16x128xbf16> to vector<16x128xf32>
    %c0_1 = arith.constant 0 : index
    %c0_2 = arith.constant 0 : index
    %2 = vector.load %arg3[%c0_1, %c0_2] : memref<16x32xbf16, #tpu.memory_space<vmem>>, vector<16x32xbf16>
    %c0_3 = arith.constant 0 : index
    %c0_4 = arith.constant 0 : index
    %3 = vector.load %arg4[%c0_3, %c0_4] : memref<16x1xf32, #tpu.memory_space<vmem>>, vector<16x1xf32>
    %c0_5 = arith.constant 0 : index
    %c0_6 = arith.constant 0 : index
    %4 = vector.load %arg5[%c0_5, %c0_6] : memref<16x32xbf16, #tpu.memory_space<vmem>>, vector<16x32xbf16>
    %c0_7 = arith.constant 0 : index
    %c0_8 = arith.constant 0 : index
    %5 = vector.load %arg6[%c0_7, %c0_8] : memref<16x1xf32, #tpu.memory_space<vmem>>, vector<16x1xf32>
    %c0_9 = arith.constant 0 : index
    %c0_10 = arith.constant 0 : index
    %6 = vector.load %arg7[%c0_9, %c0_10] : memref<16x16xbf16, #tpu.memory_space<vmem>>, vector<16x16xbf16>
    %c0_11 = arith.constant 0 : index
    %c0_12 = arith.constant 0 : index
    %7 = vector.load %arg8[%c0_11, %c0_12] : memref<16x1xf32, #tpu.memory_space<vmem>>, vector<16x1xf32>
    %c0_13 = arith.constant 0 : index
    %c0_14 = arith.constant 0 : index
    %8 = vector.load %arg2[%c0_13, %c0_14] : memref<16x128xbf16, #tpu.memory_space<vmem>>, vector<1x128xbf16>
    %c1_i32 = arith.constant 1 : i32
    %9 = tpu.dynamic_rotate %1 by %c1_i32 dim 1 : vector<16x128xf32>, i32 -> vector<16x128xf32>
    %10 = arith.truncf %9 : vector<16x128xf32> to vector<16x128xbf16>
    %11 = vector.broadcast %8 : vector<1x128xbf16> to vector<16x128xbf16>
    %12 = arith.mulf %10, %11 : vector<16x128xbf16>
    %13 = arith.truncf %1 : vector<16x128xf32> to vector<16x128xbf16>
    %14 = tpu.concatenate %12, %13 in 0 : vector<16x128xbf16>, vector<16x128xbf16> -> vector<32x128xbf16>
    %cst = arith.constant dense<0.000000e+00> : vector<16x128xf32>
    %15 = tpu.matmul %2, %14, %cst {dimension_numbers = #tpu.dot_dimension_numbers<[1], [0], [0], [1], [0, 0, 1, 1], [], []>} : vector<16x32xbf16>, vector<32x128xbf16>, vector<16x128xf32> -> vector<16x128xf32>
    %16 = vector.broadcast %3 : vector<16x1xf32> to vector<16x128xf32>
    %17 = arith.addf %15, %16 : vector<16x128xf32>
    %cst_15 = arith.constant 0.000000e+00 : f32
    %18 = vector.broadcast %cst_15 : f32 to vector<16x128xf32>
    %19 = arith.maximumf %17, %18 : vector<16x128xf32>
    %c1_i32_16 = arith.constant 1 : i32
    %20 = tpu.dynamic_rotate %19 by %c1_i32_16 dim 1 : vector<16x128xf32>, i32 -> vector<16x128xf32>
    %21 = arith.truncf %20 : vector<16x128xf32> to vector<16x128xbf16>
    %22 = vector.broadcast %8 : vector<1x128xbf16> to vector<16x128xbf16>
    %23 = arith.mulf %21, %22 : vector<16x128xbf16>
    %24 = arith.truncf %19 : vector<16x128xf32> to vector<16x128xbf16>
    %25 = tpu.concatenate %23, %24 in 0 : vector<16x128xbf16>, vector<16x128xbf16> -> vector<32x128xbf16>
    %cst_17 = arith.constant dense<0.000000e+00> : vector<16x128xf32>
    %26 = tpu.matmul %4, %25, %cst_17 {dimension_numbers = #tpu.dot_dimension_numbers<[1], [0], [0], [1], [0, 0, 1, 1], [], []>} : vector<16x32xbf16>, vector<32x128xbf16>, vector<16x128xf32> -> vector<16x128xf32>
    %27 = vector.broadcast %5 : vector<16x1xf32> to vector<16x128xf32>
    %28 = arith.addf %26, %27 : vector<16x128xf32>
    %cst_18 = arith.constant 0.000000e+00 : f32
    %29 = vector.broadcast %cst_18 : f32 to vector<16x128xf32>
    %30 = arith.maximumf %28, %29 : vector<16x128xf32>
    %31 = arith.truncf %1 : vector<16x128xf32> to vector<16x128xbf16>
    %cst_19 = arith.constant dense<0.000000e+00> : vector<16x128xf32>
    %32 = tpu.matmul %6, %31, %cst_19 {dimension_numbers = #tpu.dot_dimension_numbers<[1], [0], [0], [1], [0, 0, 1, 1], [], []>} : vector<16x16xbf16>, vector<16x128xbf16>, vector<16x128xf32> -> vector<16x128xf32>
    %33 = vector.broadcast %7 : vector<16x1xf32> to vector<16x128xf32>
    %34 = arith.addf %32, %33 : vector<16x128xf32>
    %35 = arith.addf %30, %34 : vector<16x128xf32>
    %cst_20 = arith.constant 0.000000e+00 : f32
    %36 = vector.broadcast %cst_20 : f32 to vector<16x128xf32>
    %37 = arith.maximumf %35, %36 : vector<16x128xf32>
    %c0_21 = arith.constant 0 : index
    %c0_22 = arith.constant 0 : index
    %38 = vector.load %arg9[%c0_21, %c0_22] : memref<16x32xbf16, #tpu.memory_space<vmem>>, vector<16x32xbf16>
    %c0_23 = arith.constant 0 : index
    %c0_24 = arith.constant 0 : index
    %39 = vector.load %arg10[%c0_23, %c0_24] : memref<16x1xf32, #tpu.memory_space<vmem>>, vector<16x1xf32>
    %c0_25 = arith.constant 0 : index
    %c0_26 = arith.constant 0 : index
    %40 = vector.load %arg11[%c0_25, %c0_26] : memref<16x32xbf16, #tpu.memory_space<vmem>>, vector<16x32xbf16>
    %c0_27 = arith.constant 0 : index
    %c0_28 = arith.constant 0 : index
    %41 = vector.load %arg12[%c0_27, %c0_28] : memref<16x1xf32, #tpu.memory_space<vmem>>, vector<16x1xf32>
    %c1 = arith.constant 1 : index
    %c0_29 = arith.constant 0 : index
    %42 = vector.load %arg2[%c1, %c0_29] : memref<16x128xbf16, #tpu.memory_space<vmem>>, vector<1x128xbf16>
    %c2_i32 = arith.constant 2 : i32
    %43 = tpu.dynamic_rotate %37 by %c2_i32 dim 1 : vector<16x128xf32>, i32 -> vector<16x128xf32>
    %44 = arith.truncf %43 : vector<16x128xf32> to vector<16x128xbf16>
    %45 = vector.broadcast %42 : vector<1x128xbf16> to vector<16x128xbf16>
    %46 = arith.mulf %44, %45 : vector<16x128xbf16>
    %47 = arith.truncf %37 : vector<16x128xf32> to vector<16x128xbf16>
    %48 = tpu.concatenate %46, %47 in 0 : vector<16x128xbf16>, vector<16x128xbf16> -> vector<32x128xbf16>
    %cst_30 = arith.constant dense<0.000000e+00> : vector<16x128xf32>
    %49 = tpu.matmul %38, %48, %cst_30 {dimension_numbers = #tpu.dot_dimension_numbers<[1], [0], [0], [1], [0, 0, 1, 1], [], []>} : vector<16x32xbf16>, vector<32x128xbf16>, vector<16x128xf32> -> vector<16x128xf32>
    %50 = vector.broadcast %39 : vector<16x1xf32> to vector<16x128xf32>
    %51 = arith.addf %49, %50 : vector<16x128xf32>
    %cst_31 = arith.constant 0.000000e+00 : f32
    %52 = vector.broadcast %cst_31 : f32 to vector<16x128xf32>
    %53 = arith.maximumf %51, %52 : vector<16x128xf32>
    %c2_i32_32 = arith.constant 2 : i32
    %54 = tpu.dynamic_rotate %53 by %c2_i32_32 dim 1 : vector<16x128xf32>, i32 -> vector<16x128xf32>
    %55 = arith.truncf %54 : vector<16x128xf32> to vector<16x128xbf16>
    %56 = vector.broadcast %42 : vector<1x128xbf16> to vector<16x128xbf16>
    %57 = arith.mulf %55, %56 : vector<16x128xbf16>
    %58 = arith.truncf %53 : vector<16x128xf32> to vector<16x128xbf16>
    %59 = tpu.concatenate %57, %58 in 0 : vector<16x128xbf16>, vector<16x128xbf16> -> vector<32x128xbf16>
    %cst_33 = arith.constant dense<0.000000e+00> : vector<16x128xf32>
    %60 = tpu.matmul %40, %59, %cst_33 {dimension_numbers = #tpu.dot_dimension_numbers<[1], [0], [0], [1], [0, 0, 1, 1], [], []>} : vector<16x32xbf16>, vector<32x128xbf16>, vector<16x128xf32> -> vector<16x128xf32>
    %61 = vector.broadcast %41 : vector<16x1xf32> to vector<16x128xf32>
    %62 = arith.addf %60, %61 : vector<16x128xf32>
    %cst_34 = arith.constant 0.000000e+00 : f32
    %63 = vector.broadcast %cst_34 : f32 to vector<16x128xf32>
    %64 = arith.maximumf %62, %63 : vector<16x128xf32>
    %65 = arith.addf %64, %37 : vector<16x128xf32>
    %cst_35 = arith.constant 0.000000e+00 : f32
    %66 = vector.broadcast %cst_35 : f32 to vector<16x128xf32>
    %67 = arith.maximumf %65, %66 : vector<16x128xf32>
    %68 = arith.truncf %67 : vector<16x128xf32> to vector<16x128xbf16>
    %c0_36 = arith.constant 0 : index
    %c0_37 = arith.constant 0 : index
    %69 = vector.load %arg13[%c0_36, %c0_37] : memref<16x128xbf16, #tpu.memory_space<vmem>>, vector<16x128xbf16>
    tpu.vector_store %arg13[%c0_36, %c0_37], %68 {strides = array<i32>} : memref<16x128xbf16, #tpu.memory_space<vmem>>, vector<16x128xbf16>,
    return
  }
  func.func @transform_0(%arg0: i32) -> (i32, i32) {
    %c0_i32 = arith.constant 0 : i32
    %c0_i32_0 = arith.constant 0 : i32
    return %c0_i32, %arg0 : i32, i32
  }
  func.func @transform_1(%arg0: i32) -> (i32, i32) {
    %c0_i32 = arith.constant 0 : i32
    %c0_i32_0 = arith.constant 0 : i32
    %c0_i32_1 = arith.constant 0 : i32
    return %c0_i32, %c0_i32_0 : i32, i32
  }
  func.func @transform_2(%arg0: i32) -> (i32, i32) {
    %c0_i32 = arith.constant 0 : i32
    %c0_i32_0 = arith.constant 0 : i32
    %c0_i32_1 = arith.constant 0 : i32
    return %c0_i32, %c0_i32_0 : i32, i32
  }
  func.func @transform_3(%arg0: i32) -> (i32, i32) {
    %c0_i32 = arith.constant 0 : i32
    %c0_i32_0 = arith.constant 0 : i32
    %c0_i32_1 = arith.constant 0 : i32
    return %c0_i32, %c0_i32_0 : i32, i32
  }
  func.func @transform_4(%arg0: i32) -> (i32, i32) {
    %c0_i32 = arith.constant 0 : i32
    %c0_i32_0 = arith.constant 0 : i32
    %c0_i32_1 = arith.constant 0 : i32
    return %c0_i32, %c0_i32_0 : i32, i32
  }
  func.func @transform_5(%arg0: i32) -> (i32, i32) {
    %c0_i32 = arith.constant 0 : i32
    %c0_i32_0 = arith.constant 0 : i32
    %c0_i32_1 = arith.constant 0 : i32
    return %c0_i32, %c0_i32_0 : i32, i32
  }
  func.func @transform_6(%arg0: i32) -> (i32, i32) {
    %c0_i32 = arith.constant 0 : i32
    %c0_i32_0 = arith.constant 0 : i32
    %c0_i32_1 = arith.constant 0 : i32
    return %c0_i32, %c0_i32_0 : i32, i32
  }
  func.func @transform_7(%arg0: i32) -> (i32, i32) {
    %c0_i32 = arith.constant 0 : i32
    %c0_i32_0 = arith.constant 0 : i32
    %c0_i32_1 = arith.constant 0 : i32
    return %c0_i32, %c0_i32_0 : i32, i32
  }
  func.func @transform_8(%arg0: i32) -> (i32, i32) {
    %c0_i32 = arith.constant 0 : i32
    %c0_i32_0 = arith.constant 0 : i32
    %c0_i32_1 = arith.constant 0 : i32
    return %c0_i32, %c0_i32_0 : i32, i32
  }
  func.func @transform_9(%arg0: i32) -> (i32, i32) {
    %c0_i32 = arith.constant 0 : i32
    %c0_i32_0 = arith.constant 0 : i32
    %c0_i32_1 = arith.constant 0 : i32
    return %c0_i32, %c0_i32_0 : i32, i32
  }
  func.func @transform_10(%arg0: i32) -> (i32, i32) {
    %c0_i32 = arith.constant 0 : i32
    %c0_i32_0 = arith.constant 0 : i32
    %c0_i32_1 = arith.constant 0 : i32
    return %c0_i32, %c0_i32_0 : i32, i32
  }
  func.func @transform_11(%arg0: i32) -> (i32, i32) {
    %c0_i32 = arith.constant 0 : i32
    %c0_i32_0 = arith.constant 0 : i32
    %c0_i32_1 = arith.constant 0 : i32
    return %c0_i32, %c0_i32_0 : i32, i32
  }
  func.func @transform_12(%arg0: i32) -> (i32, i32) {
    %c0_i32 = arith.constant 0 : i32
    %c0_i32_0 = arith.constant 0 : i32
    return %c0_i32, %arg0 : i32, i32
  }
}

</mosaic_0001>

<llo_original>
// kernel: tpu_custom_call.1
$region0: #{tpu_custom_call.1}
  #allocation0 [shape = 'u32[]', space=smem, size = 0x4, offset = 0x4, fixed_abs, tag = 'smem constant byte address 0x4 - core index']
  #allocation1 [shape = 'u32[144,128]{1,0:T(1,128)}', space=vmem, size = 0x12000, scoped, tag = 'internal scratch']
  %s0 = inlined_call_operand.vmem [shape: bf16[16,256], index: 0, kind: input, shape index: {}]
  %s1 = inlined_call_operand.vmem [shape: bf16[16,128], index: 1, kind: input, shape index: {}]
  %s2 = inlined_call_operand.vmem [shape: bf16[16,32], index: 2, kind: input, shape index: {}]
  %s3 = inlined_call_operand.vmem [shape: f32[16,1], index: 3, kind: input, shape index: {}]
  %s4 = inlined_call_operand.vmem [shape: bf16[16,32], index: 4, kind: input, shape index: {}]
  %s5 = inlined_call_operand.vmem [shape: f32[16,1], index: 5, kind: input, shape index: {}]
  %s6 = inlined_call_operand.vmem [shape: bf16[16,16], index: 6, kind: input, shape index: {}]
  %s7 = inlined_call_operand.vmem [shape: f32[16,1], index: 7, kind: input, shape index: {}]
  %s8 = inlined_call_operand.vmem [shape: bf16[16,32], index: 8, kind: input, shape index: {}]
  %s9 = inlined_call_operand.vmem [shape: f32[16,1], index: 9, kind: input, shape index: {}]
  %s10 = inlined_call_operand.vmem [shape: bf16[16,32], index: 10, kind: input, shape index: {}]
  %s11 = inlined_call_operand.vmem [shape: f32[16,1], index: 11, kind: input, shape index: {}]
  %s12 = inlined_call_operand.hbm [shape: bf16[16,256], index: 12, kind: output, shape index: {}]
  %s13 = sld [smem:[#allocation0]]
  $region122: #{tpu_custom_call.1} parent=0
    _
  %s15 = ssub.s32 1, %s13
  %s16 = scalar_select 0, %s15, %s13
  $region1: #{tpu_custom_call.1} parent=0
    #allocation2 [shape = 'u8[8192]{0}', space=vmem, size = 0x2000, scoped, tag = 'input window, operand 0']
    #allocation3 [shape = 'u8[8192]{0}', space=vmem, size = 0x2000, scoped, tag = 'output window, operand 0']
    #allocation4 [shape = 's32[2]{0}', space=sflag, size = 0x8, scoped, tag = 'scoped memory for tpu_custom_call.1']
    %17 = vsyncpa [#allocation4], 0
    %s18 = scalar_lea.sflag [#allocation4], 1
    %19 = vsyncpa %s18, 0
    loop: start=0, step=1, limit=4
    $region2: #{tpu_custom_call.1} parent=1 // loop_pre_header
      _
    $region3: #{tpu_custom_call.1} parent=1 // loop_header
      %s21 = sphi 0, %s25
      %p22 = scmp.ge.s32.totalorder %s21, 4
      %s31 = sphi 0, %s33
      %s34 = sphi 0, %s31
      %s35 = sphi 0, %s34
      %s51 = sphi 0, %s35
      %s55 = sphi 0, %s55
      %s57 = sphi 0, %s55
      %s58 = sphi 0, %s57
      %s72 = sphi 0, %s58
      %s76 = sphi 0, %s76
      %s78 = sphi 0, %s76
      %s79 = sphi 0, %s78
      %s93 = sphi 0, %s79
      %s97 = sphi 0, %s97
      %s99 = sphi 0, %s97
      %s100 = sphi 0, %s99
      %s114 = sphi 0, %s100
      %s118 = sphi 0, %s118
      %s120 = sphi 0, %s118
      %s121 = sphi 0, %s120
      %s135 = sphi 0, %s121
      %s139 = sphi 0, %s139
      %s141 = sphi 0, %s139
      %s142 = sphi 0, %s141
      %s156 = sphi 0, %s142
      %s160 = sphi 0, %s160
      %s162 = sphi 0, %s160
      %s163 = sphi 0, %s162
      %s177 = sphi 0, %s163
      %s181 = sphi 0, %s181
      %s183 = sphi 0, %s181
      %s184 = sphi 0, %s183
      %s198 = sphi 0, %s184
      %s202 = sphi 0, %s202
      %s204 = sphi 0, %s202
      %s205 = sphi 0, %s204
      %s219 = sphi 0, %s205
      %s223 = sphi 0, %s223
      %s225 = sphi 0, %s223
      %s226 = sphi 0, %s225
      %s240 = sphi 0, %s226
      %s244 = sphi 0, %s244
      %s246 = sphi 0, %s244
      %s247 = sphi 0, %s246
      %s261 = sphi 0, %s247
      %s265 = sphi 0, %s265
      %s267 = sphi 0, %s265
      %s268 = sphi 0, %s267
      %s282 = sphi 0, %s268
      %s288 = sphi 0, %s290
      %s291 = sphi 0, %s288
      %s292 = sphi 0, %s291
      %s308 = sphi 0, %s292
    $region4: #{tpu_custom_call.1} parent=1 // loop_header_branch
      %24 = sbr.rel (%p22) target = $region8
    $region5: #{tpu_custom_call.1} parent=1 // loop_body
      %s26 = ssub.s32 %s21, 1
      %s27 = ssub.s32 %s21, 2
      %s28 = sadd.s32 %s21, 1
      %s29 = ssub.s32 %s21, %s28
      %p30 = scmp.eq.s32.totalorder %s29, 0
      %s32 = sadd.s32 %s31, 1
      %s33 = scalar_select %p30, %s31, %s32
      %p36 = pneg %p30
      %p37 = scmp.eq.s32.totalorder %s21, 1
      %p38 = por %p36, %p37
      %p39 = scmp.ne.s32.totalorder %s31, %s34
      %p40 = scmp.eq.s32.totalorder %s21, 0
      %p41 = por %p39, %p40
      %p42 = scmp.ne.s32.totalorder %s31, %s34
      %p43 = scmp.eq.s32.totalorder %s26, 1
      %p44 = por %p42, %p43
      %p45 = scmp.ne.s32.totalorder %s34, %s35
      %p46 = scmp.eq.s32.totalorder %s26, 0
      %p47 = por %p45, %p46
      %p48 = scmp.ne.s32.totalorder %s34, %s35
      %p49 = scmp.eq.s32.totalorder %s27, 1
      %p50 = por %p48, %p49
      %p52 = scmp.ne.s32.totalorder %s35, %s51
      %p53 = scmp.eq.s32.totalorder %s27, 0
      %p54 = por %p52, %p53
      %s56 = sadd.s32 %s55, 1
      %p59 = scmp.eq.s32.totalorder %s21, 1
      %p60 = scmp.ne.s32.totalorder %s55, %s57
      %p61 = scmp.eq.s32.totalorder %s21, 0
      %p62 = por %p60, %p61
      %p63 = scmp.ne.s32.totalorder %s55, %s57
      %p64 = scmp.eq.s32.totalorder %s26, 1
      %p65 = por %p63, %p64
      %p66 = scmp.ne.s32.totalorder %s57, %s58
      %p67 = scmp.eq.s32.totalorder %s26, 0
      %p68 = por %p66, %p67
      %p69 = scmp.ne.s32.totalorder %s57, %s58
      %p70 = scmp.eq.s32.totalorder %s27, 1
      %p71 = por %p69, %p70
      %p73 = scmp.ne.s32.totalorder %s58, %s72
      %p74 = scmp.eq.s32.totalorder %s27, 0
      %p75 = por %p73, %p74
      %s77 = sadd.s32 %s76, 1
      %p80 = scmp.eq.s32.totalorder %s21, 1
      %p81 = scmp.ne.s32.totalorder %s76, %s78
      %p82 = scmp.eq.s32.totalorder %s21, 0
      %p83 = por %p81, %p82
      %p84 = scmp.ne.s32.totalorder %s76, %s78
      %p85 = scmp.eq.s32.totalorder %s26, 1
      %p86 = por %p84, %p85
      %p87 = scmp.ne.s32.totalorder %s78, %s79
      %p88 = scmp.eq.s32.totalorder %s26, 0
      %p89 = por %p87, %p88
      %p90 = scmp.ne.s32.totalorder %s78, %s79
      %p91 = scmp.eq.s32.totalorder %s27, 1
      %p92 = por %p90, %p91
      %p94 = scmp.ne.s32.totalorder %s79, %s93
      %p95 = scmp.eq.s32.totalorder %s27, 0
      %p96 = por %p94, %p95
      %s98 = sadd.s32 %s97, 1
      %p101 = scmp.eq.s32.totalorder %s21, 1
      %p102 = scmp.ne.s32.totalorder %s97, %s99
      %p103 = scmp.eq.s32.totalorder %s21, 0
      %p104 = por %p102, %p103
      %p105 = scmp.ne.s32.totalorder %s97, %s99
      %p106 = scmp.eq.s32.totalorder %s26, 1
      %p107 = por %p105, %p106
      %p108 = scmp.ne.s32.totalorder %s99, %s100
      %p109 = scmp.eq.s32.totalorder %s26, 0
      %p110 = por %p108, %p109
      %p111 = scmp.ne.s32.totalorder %s99, %s100
      %p112 = scmp.eq.s32.totalorder %s27, 1
      %p113 = por %p111, %p112
      %p115 = scmp.ne.s32.totalorder %s100, %s114
      %p116 = scmp.eq.s32.totalorder %s27, 0
      %p117 = por %p115, %p116
      %s119 = sadd.s32 %s118, 1
      %p122 = scmp.eq.s32.totalorder %s21, 1
      %p123 = scmp.ne.s32.totalorder %s118, %s120
      %p124 = scmp.eq.s32.totalorder %s21, 0
      %p125 = por %p123, %p124
      %p126 = scmp.ne.s32.totalorder %s118, %s120
      %p127 = scmp.eq.s32.totalorder %s26, 1
      %p128 = por %p126, %p127
      %p129 = scmp.ne.s32.totalorder %s120, %s121
      %p130 = scmp.eq.s32.totalorder %s26, 0
      %p131 = por %p129, %p130
      %p132 = scmp.ne.s32.totalorder %s120, %s121
      %p133 = scmp.eq.s32.totalorder %s27, 1
      %p134 = por %p132, %p133
      %p136 = scmp.ne.s32.totalorder %s121, %s135
      %p137 = scmp.eq.s32.totalorder %s27, 0
      %p138 = por %p136, %p137
      %s140 = sadd.s32 %s139, 1
      %p143 = scmp.eq.s32.totalorder %s21, 1
      %p144 = scmp.ne.s32.totalorder %s139, %s141
      %p145 = scmp.eq.s32.totalorder %s21, 0
      %p146 = por %p144, %p145
      %p147 = scmp.ne.s32.totalorder %s139, %s141
      %p148 = scmp.eq.s32.totalorder %s26, 1
      %p149 = por %p147, %p148
      %p150 = scmp.ne.s32.totalorder %s141, %s142
      %p151 = scmp.eq.s32.totalorder %s26, 0
      %p152 = por %p150, %p151
      %p153 = scmp.ne.s32.totalorder %s141, %s142
      %p154 = scmp.eq.s32.totalorder %s27, 1
      %p155 = por %p153, %p154
      %p157 = scmp.ne.s32.totalorder %s142, %s156
      %p158 = scmp.eq.s32.totalorder %s27, 0
      %p159 = por %p157, %p158
      %s161 = sadd.s32 %s160, 1
      %p164 = scmp.eq.s32.totalorder %s21, 1
      %p165 = scmp.ne.s32.totalorder %s160, %s162
      %p166 = scmp.eq.s32.totalorder %s21, 0
      %p167 = por %p165, %p166
      %p168 = scmp.ne.s32.totalorder %s160, %s162
      %p169 = scmp.eq.s32.totalorder %s26, 1
      %p170 = por %p168, %p169
      %p171 = scmp.ne.s32.totalorder %s162, %s163
      %p172 = scmp.eq.s32.totalorder %s26, 0
      %p173 = por %p171, %p172
      %p174 = scmp.ne.s32.totalorder %s162, %s163
      %p175 = scmp.eq.s32.totalorder %s27, 1
      %p176 = por %p174, %p175
      %p178 = scmp.ne.s32.totalorder %s163, %s177
      %p179 = scmp.eq.s32.totalorder %s27, 0
      %p180 = por %p178, %p179
      %s182 = sadd.s32 %s181, 1
      %p185 = scmp.eq.s32.totalorder %s21, 1
      %p186 = scmp.ne.s32.totalorder %s181, %s183
      %p187 = scmp.eq.s32.totalorder %s21, 0
      %p188 = por %p186, %p187
      %p189 = scmp.ne.s32.totalorder %s181, %s183
      %p190 = scmp.eq.s32.totalorder %s26, 1
      %p191 = por %p189, %p190
      %p192 = scmp.ne.s32.totalorder %s183, %s184
      %p193 = scmp.eq.s32.totalorder %s26, 0
      %p194 = por %p192, %p193
      %p195 = scmp.ne.s32.totalorder %s183, %s184
      %p196 = scmp.eq.s32.totalorder %s27, 1
      %p197 = por %p195, %p196
      %p199 = scmp.ne.s32.totalorder %s184, %s198
      %p200 = scmp.eq.s32.totalorder %s27, 0
      %p201 = por %p199, %p200
      %s203 = sadd.s32 %s202, 1
      %p206 = scmp.eq.s32.totalorder %s21, 1
      %p207 = scmp.ne.s32.totalorder %s202, %s204
      %p208 = scmp.eq.s32.totalorder %s21, 0
      %p209 = por %p207, %p208
      %p210 = scmp.ne.s32.totalorder %s202, %s204
      %p211 = scmp.eq.s32.totalorder %s26, 1
      %p212 = por %p210, %p211
      %p213 = scmp.ne.s32.totalorder %s204, %s205
      %p214 = scmp.eq.s32.totalorder %s26, 0
      %p215 = por %p213, %p214
      %p216 = scmp.ne.s32.totalorder %s204, %s205
      %p217 = scmp.eq.s32.totalorder %s27, 1
      %p218 = por %p216, %p217
      %p220 = scmp.ne.s32.totalorder %s205, %s219
      %p221 = scmp.eq.s32.totalorder %s27, 0
      %p222 = por %p220, %p221
      %s224 = sadd.s32 %s223, 1
      %p227 = scmp.eq.s32.totalorder %s21, 1
      %p228 = scmp.ne.s32.totalorder %s223, %s225
      %p229 = scmp.eq.s32.totalorder %s21, 0
      %p230 = por %p228, %p229
      %p231 = scmp.ne.s32.totalorder %s223, %s225
      %p232 = scmp.eq.s32.totalorder %s26, 1
      %p233 = por %p231, %p232
      %p234 = scmp.ne.s32.totalorder %s225, %s226
      %p235 = scmp.eq.s32.totalorder %s26, 0
      %p236 = por %p234, %p235
      %p237 = scmp.ne.s32.totalorder %s225, %s226
      %p238 = scmp.eq.s32.totalorder %s27, 1
      %p239 = por %p237, %p238
      %p241 = scmp.ne.s32.totalorder %s226, %s240
      %p242 = scmp.eq.s32.totalorder %s27, 0
      %p243 = por %p241, %p242
      %s245 = sadd.s32 %s244, 1
      %p248 = scmp.eq.s32.totalorder %s21, 1
      %p249 = scmp.ne.s32.totalorder %s244, %s246
      %p250 = scmp.eq.s32.totalorder %s21, 0
      %p251 = por %p249, %p250
      %p252 = scmp.ne.s32.totalorder %s244, %s246
      %p253 = scmp.eq.s32.totalorder %s26, 1
      %p254 = por %p252, %p253
      %p255 = scmp.ne.s32.totalorder %s246, %s247
      %p256 = scmp.eq.s32.totalorder %s26, 0
      %p257 = por %p255, %p256
      %p258 = scmp.ne.s32.totalorder %s246, %s247
      %p259 = scmp.eq.s32.totalorder %s27, 1
      %p260 = por %p258, %p259
      %p262 = scmp.ne.s32.totalorder %s247, %s261
      %p263 = scmp.eq.s32.totalorder %s27, 0
      %p264 = por %p262, %p263
      %s266 = sadd.s32 %s265, 1
      %p269 = scmp.eq.s32.totalorder %s21, 1
      %p270 = scmp.ne.s32.totalorder %s265, %s267
      %p271 = scmp.eq.s32.totalorder %s21, 0
      %p272 = por %p270, %p271
      %p273 = scmp.ne.s32.totalorder %s265, %s267
      %p274 = scmp.eq.s32.totalorder %s26, 1
      %p275 = por %p273, %p274
      %p276 = scmp.ne.s32.totalorder %s267, %s268
      %p277 = scmp.eq.s32.totalorder %s26, 0
      %p278 = por %p276, %p277
      %p279 = scmp.ne.s32.totalorder %s267, %s268
      %p280 = scmp.eq.s32.totalorder %s27, 1
      %p281 = por %p279, %p280
      %p283 = scmp.ne.s32.totalorder %s268, %s282
      %p284 = scmp.eq.s32.totalorder %s27, 0
      %p285 = por %p283, %p284
      %s286 = ssub.s32 %s21, %s28
      %p287 = scmp.eq.s32.totalorder %s286, 0
      %s289 = sadd.s32 %s288, 1
      %s290 = scalar_select %p287, %s288, %s289
      %p293 = pneg %p287
      %p294 = scmp.eq.s32.totalorder %s21, 1
      %p295 = por %p293, %p294
      %p296 = scmp.ne.s32.totalorder %s288, %s291
      %p297 = scmp.eq.s32.totalorder %s21, 0
      %p298 = por %p296, %p297
      %p299 = scmp.ne.s32.totalorder %s288, %s291
      %p300 = scmp.eq.s32.totalorder %s26, 1
      %p301 = por %p299, %p300
      %p302 = scmp.ne.s32.totalorder %s291, %s292
      %p303 = scmp.eq.s32.totalorder %s26, 0
      %p304 = por %p302, %p303
      %p305 = scmp.ne.s32.totalorder %s291, %s292
      %p306 = scmp.eq.s32.totalorder %s27, 1
      %p307 = por %p305, %p306
      %p309 = scmp.ne.s32.totalorder %s292, %s308
      %p310 = scmp.eq.s32.totalorder %s27, 0
      %p311 = por %p309, %p310
      %p312 = scmp.le.s32.totalorder 1, %s21
      %p313 = scmp.lt.s32.totalorder %s21, 3
      %p314 = pnand %p312, %p313
      %p315 = pneg %p314
      // Predicated region
      $region9: #{tpu_custom_call.1} parent=5 // pred_check
        _
      $region10: #{tpu_custom_call.1} parent=5 // pred_check_branch
        %317 = sbr.rel (%p314) target = $region12
      $region11: #{tpu_custom_call.1} parent=5 // pred_region
        %s318 = ssub.s32 %s21, 1
        // Predicated region
        $region13: #{tpu_custom_call.1} parent=11 // pred_check
          %p319 = pneg %p68
        $region14: #{tpu_custom_call.1} parent=11 // pred_check_branch
          %321 = sbr.rel (%p319) target = $region16
        $region15: #{tpu_custom_call.1} parent=11 // pred_region
          _
        $region16: #{tpu_custom_call.1} parent=11 // pred_fallthru
          _
        // Predicated region
        $region17: #{tpu_custom_call.1} parent=11 // pred_check
          %p322 = pneg %p89
        $region18: #{tpu_custom_call.1} parent=11 // pred_check_branch
          %324 = sbr.rel (%p322) target = $region20
        $region19: #{tpu_custom_call.1} parent=11 // pred_region
          _
        $region20: #{tpu_custom_call.1} parent=11 // pred_fallthru
          _
        // Predicated region
        $region21: #{tpu_custom_call.1} parent=11 // pred_check
          %p325 = pneg %p110
        $region22: #{tpu_custom_call.1} parent=11 // pred_check_branch
          %327 = sbr.rel (%p325) target = $region24
        $region23: #{tpu_custom_call.1} parent=11 // pred_region
          _
        $region24: #{tpu_custom_call.1} parent=11 // pred_fallthru
          _
        // Predicated region
        $region25: #{tpu_custom_call.1} parent=11 // pred_check
          %p328 = pneg %p131
        $region26: #{tpu_custom_call.1} parent=11 // pred_check_branch
          %330 = sbr.rel (%p328) target = $region28
        $region27: #{tpu_custom_call.1} parent=11 // pred_region
          _
        $region28: #{tpu_custom_call.1} parent=11 // pred_fallthru
          _
        // Predicated region
        $region29: #{tpu_custom_call.1} parent=11 // pred_check
          %p331 = pneg %p152
        $region30: #{tpu_custom_call.1} parent=11 // pred_check_branch
          %333 = sbr.rel (%p331) target = $region32
        $region31: #{tpu_custom_call.1} parent=11 // pred_region
          _
        $region32: #{tpu_custom_call.1} parent=11 // pred_fallthru
          _
        // Predicated region
        $region33: #{tpu_custom_call.1} parent=11 // pred_check
          %p334 = pneg %p173
        $region34: #{tpu_custom_call.1} parent=11 // pred_check_branch
          %336 = sbr.rel (%p334) target = $region36
        $region35: #{tpu_custom_call.1} parent=11 // pred_region
          _
        $region36: #{tpu_custom_call.1} parent=11 // pred_fallthru
          _
        // Predicated region
        $region37: #{tpu_custom_call.1} parent=11 // pred_check
          %p337 = pneg %p194
        $region38: #{tpu_custom_call.1} parent=11 // pred_check_branch
          %339 = sbr.rel (%p337) target = $region40
        $region39: #{tpu_custom_call.1} parent=11 // pred_region
          _
        $region40: #{tpu_custom_call.1} parent=11 // pred_fallthru
          _
        // Predicated region
        $region41: #{tpu_custom_call.1} parent=11 // pred_check
          %p340 = pneg %p215
        $region42: #{tpu_custom_call.1} parent=11 // pred_check_branch
          %342 = sbr.rel (%p340) target = $region44
        $region43: #{tpu_custom_call.1} parent=11 // pred_region
          _
        $region44: #{tpu_custom_call.1} parent=11 // pred_fallthru
          _
        // Predicated region
        $region45: #{tpu_custom_call.1} parent=11 // pred_check
          %p343 = pneg %p236
        $region46: #{tpu_custom_call.1} parent=11 // pred_check_branch
          %345 = sbr.rel (%p343) target = $region48
        $region47: #{tpu_custom_call.1} parent=11 // pred_region
          _
        $region48: #{tpu_custom_call.1} parent=11 // pred_fallthru
          _
        // Predicated region
        $region49: #{tpu_custom_call.1} parent=11 // pred_check
          %p346 = pneg %p257
        $region50: #{tpu_custom_call.1} parent=11 // pred_check_branch
          %348 = sbr.rel (%p346) target = $region52
        $region51: #{tpu_custom_call.1} parent=11 // pred_region
          _
        $region52: #{tpu_custom_call.1} parent=11 // pred_fallthru
          _
        // Predicated region
        $region53: #{tpu_custom_call.1} parent=11 // pred_check
          %p349 = pneg %p278
        $region54: #{tpu_custom_call.1} parent=11 // pred_check_branch
          %351 = sbr.rel (%p349) target = $region56
        $region55: #{tpu_custom_call.1} parent=11 // pred_region
          _
        $region56: #{tpu_custom_call.1} parent=11 // pred_fallthru
          _
      $region12: #{tpu_custom_call.1} parent=5 // pred_fallthru
        _
      %p352 = scmp.lt.s32.totalorder %s21, 2
      // Predicated region
      $region57: #{tpu_custom_call.1} parent=5 // pred_check
        %p353 = pneg %p352
      $region58: #{tpu_custom_call.1} parent=5 // pred_check_branch
        %355 = sbr.rel (%p353) target = $region60
      $region59: #{tpu_custom_call.1} parent=5 // pred_region
        // Predicated region
        $region61: #{tpu_custom_call.1} parent=59 // pred_check
          %p356 = pneg %p41
        $region62: #{tpu_custom_call.1} parent=59 // pred_check_branch
          %358 = sbr.rel (%p356) target = $region64
        $region63: #{tpu_custom_call.1} parent=59 // pred_region
          %s359 = sand.u32 %s31, 1
          %s360 = sand.u32 %s31, 1
          %s361 = smul.addr %s360, 8
          %s362 = scalar_lea.vmem [#allocation2], %s361
          %s363 = smul.addr %s21, 4
          %s364 = scalar_lea.vmem %s0, %s363
          // Predicated region
          $region65: #{tpu_custom_call.1} parent=63 // pred_check
            _
          $region66: #{tpu_custom_call.1} parent=63 // pred_check_branch
            %366 = sbr.rel (0) target = $region68
          $region67: #{tpu_custom_call.1} parent=63 // pred_region
            // Predicated region
            $region69: #{tpu_custom_call.1} parent=67 // pred_check
              _
            $region70: #{tpu_custom_call.1} parent=67 // pred_check_branch
              %368 = sbr.rel target = $region72
            $region71: #{tpu_custom_call.1} parent=67 // pred_region
              // Predicated region
              $region84: #{tpu_custom_call.1} parent=71 // pred_check
                _
              $region85: #{tpu_custom_call.1} parent=71 // pred_check_branch
                %385 = sbr.rel (0) target = $region87
              $region86: #{tpu_custom_call.1} parent=71 // pred_region
                loop: start=0, step=1, limit=1
                $region88: #{tpu_custom_call.1} parent=86 // loop_pre_header
                  _
                $region89: #{tpu_custom_call.1} parent=86 // loop_header
                  %s387 = sphi 0, %s391
                  %p388 = scmp.ge.s32.totalorder %s387, 1
                  %s392 = sphi %s364, %s364
                  %s393 = sphi %s362, %s362
                $region90: #{tpu_custom_call.1} parent=86 // loop_header_branch
                  %390 = sbr.rel (%p388) target = $region94
                $region91: #{tpu_custom_call.1} parent=86 // loop_body
                  _
                $region92: #{tpu_custom_call.1} parent=86 // loop_footer
                  %s391 = sadd.s32 1, %s387
                $region93: #{tpu_custom_call.1} parent=86 // loop_footer_branch
                  %386 = sbr.rel target = $region89
                $region94: #{tpu_custom_call.1} parent=86 // loop_exit
                  _
                loop: start=0, step=1, limit=1
                $region95: #{tpu_custom_call.1} parent=86 // loop_pre_header
                  _
                $region96: #{tpu_custom_call.1} parent=86 // loop_header
                  %s396 = sphi 0, %s400
                  %p397 = scmp.ge.s32.totalorder %s396, 1
                  %s401 = sphi %s364, %s364
                  %s402 = sphi %s362, %s362
                $region97: #{tpu_custom_call.1} parent=86 // loop_header_branch
                  %399 = sbr.rel (%p397) target = $region101
                $region98: #{tpu_custom_call.1} parent=86 // loop_body
                  %v403 = vld [vmem:[%s401] sm:$0xf]
                  %404 = vst [vmem:[%s402] sm:$0xf] %v403
                  %v405 = vld [vmem:[%s401 + $0x8] sm:$0xf]
                  %406 = vst [vmem:[%s402 + $0x4] sm:$0xf] %v405
                $region99: #{tpu_custom_call.1} parent=86 // loop_footer
                  %s400 = sadd.s32 1, %s396
                $region100: #{tpu_custom_call.1} parent=86 // loop_footer_branch
                  %395 = sbr.rel target = $region96
                $region101: #{tpu_custom_call.1} parent=86 // loop_exit
                  _
              $region87: #{tpu_custom_call.1} parent=71 // pred_fallthru
                _
            $region72: #{tpu_custom_call.1} parent=67 // pred_fallthru
              _
            // Predicated region
            $region73: #{tpu_custom_call.1} parent=67 // pred_check
              _
            $region74: #{tpu_custom_call.1} parent=67 // pred_check_branch
              %370 = sbr.rel (0) target = $region76
            $region75: #{tpu_custom_call.1} parent=67 // pred_region
              loop: start=0, step=1, limit=1
              $region77: #{tpu_custom_call.1} parent=75 // loop_pre_header
                _
              $region78: #{tpu_custom_call.1} parent=75 // loop_header
                %s373 = sphi 0, %s377
                %p374 = scmp.ge.s32.totalorder %s373, 1
                %s378 = sphi %s364, %s364
                %s379 = sphi %s362, %s362
              $region79: #{tpu_custom_call.1} parent=75 // loop_header_branch
                %376 = sbr.rel (%p374) target = $region83
              $region80: #{tpu_custom_call.1} parent=75 // loop_body
                %v380 = vld [vmem:[%s378] sm:$0xf]
                %381 = vst [vmem:[%s379] sm:$0xf] %v380
                %v382 = vld [vmem:[%s378 + $0x8] sm:$0xf]
                %383 = vst [vmem:[%s379 + $0x4] sm:$0xf] %v382
              $region81: #{tpu_custom_call.1} parent=75 // loop_footer
                %s377 = sadd.s32 1, %s373
              $region82: #{tpu_custom_call.1} parent=75 // loop_footer_branch
                %372 = sbr.rel target = $region78
              $region83: #{tpu_custom_call.1} parent=75 // loop_exit
                _
            $region76: #{tpu_custom_call.1} parent=67 // pred_fallthru
              _
          $region68: #{tpu_custom_call.1} parent=63 // pred_fallthru
            _
          %407 = vnop
        $region64: #{tpu_custom_call.1} parent=59 // pred_fallthru
          _
      $region60: #{tpu_custom_call.1} parent=5 // pred_fallthru
        _
      %p408 = scmp.le.s32.totalorder 1, %s21
      %p409 = scmp.lt.s32.totalorder %s21, 3
      %p410 = pnand %p408, %p409
      %p411 = pneg %p410
      // Predicated region
      $region102: #{tpu_custom_call.1} parent=5 // pred_check
        _
      $region103: #{tpu_custom_call.1} parent=5 // pred_check_branch
        %413 = sbr.rel (%p410) target = $region105
      $region104: #{tpu_custom_call.1} parent=5 // pred_region
        %s414 = ssub.s32 %s21, 1
        %s415 = sand.u32 %s34, 1
        %s416 = sand.u32 %s34, 1
        %s417 = smul.addr %s416, 8
        %s418 = scalar_lea.vmem [#allocation2], %s417
        // Predicated region
        $region106: #{tpu_custom_call.1} parent=104 // pred_check
          %p419 = pneg %p47
        $region107: #{tpu_custom_call.1} parent=104 // pred_check_branch
          %421 = sbr.rel (%p419) target = $region109
        $region108: #{tpu_custom_call.1} parent=104 // pred_region
          _
        $region109: #{tpu_custom_call.1} parent=104 // pred_fallthru
          _
        %s422 = sand.u32 %s34, 1
        %s423 = sand.u32 %s34, 1
        %s424 = smul.addr %s423, 8
        %s425 = scalar_lea.vmem [#allocation2], %s424
        %p426 = pneg %p47
        %p427 = pneg %p44
        %p428 = pneg %p68
        %p429 = pneg %p65
        %p430 = pneg %p89
        %p431 = pneg %p86
        %p432 = pneg %p110
        %p433 = pneg %p107
        %p434 = pneg %p131
        %p435 = pneg %p128
        %p436 = pneg %p152
        %p437 = pneg %p149
        %p438 = pneg %p173
        %p439 = pneg %p170
        %p440 = pneg %p194
        %p441 = pneg %p191
        %p442 = pneg %p215
        %p443 = pneg %p212
        %p444 = pneg %p236
        %p445 = pneg %p233
        %p446 = pneg %p257
        %p447 = pneg %p254
        %p448 = pneg %p278
        %p449 = pneg %p275
        %p450 = pneg %p304
        %p451 = pneg %p301
        %s452 = sand.u32 %s291, 1
        %s453 = scalar_lea.sflag [#allocation4], %s452
        %s454 = sand.u32 %s291, 1
        %s455 = smul.addr %s454, 8
        %s456 = scalar_lea.vmem [#allocation3], %s455
        %v458 = vld [vmem:[%s418] sm:$0xf]
        %v459 = vld [vmem:[%s418 + $0x4] sm:$0xf]
        %v460 = vunpack.c.l.bf16 %v458
        %v461 = vunpack.c.l.bf16 %v459
        %v462 = vld [vmem:[%s2] sm:$0xf]
        %v463 = vld [vmem:[%s2 + $0x4] sm:$0xf]
        %v464 = vld [vmem:[%s3] sm:$0xff]
        %v465 = vld [vmem:[%s3 + $0x8] sm:$0xff]
        %v466 = vld [vmem:[%s4] sm:$0xf]
        %v467 = vld [vmem:[%s4 + $0x4] sm:$0xf]
        %v468 = vld [vmem:[%s5] sm:$0xff]
        %v469 = vld [vmem:[%s5 + $0x8] sm:$0xff]
        %v470 = vld [vmem:[%s6] sm:$0xf]
        %v471 = vld [vmem:[%s6 + $0x4] sm:$0xf]
        %v472 = vld [vmem:[%s7] sm:$0xff]
        %v473 = vld [vmem:[%s7 + $0x8] sm:$0xff]
        %v474 = vld [vmem:[%s1] sm:$0x1]
        %475 = vrot.lane.b32.xlu0 %v460, 1
        %v476 = vpop.permute.xlu0 %475
        %477 = vrot.lane.b32.xlu0 %v461, 1
        %v478 = vpop.permute.xlu0 %477
        %v479 = vpack.c.bf16 %v478, %v476
        %v481 = vpack.i.b16 %v474, %v474
        %v483 = vlaneseq
        %v484 = vshrl.u32 %v483, 7
        %v485 = vsub.s32 0, %v484
        %v486 = vrot.slane %v481, %v485
        %v487 = vmul.bf16 %v479, %v486
        %v490 = vunpack.c.l.b16 %v458
        %v491 = vunpack.c.l.b16 %v459
        %v492 = vpack.c.b16 %v491, %v490
        %495 = vset.pattern.permute.xlu0 0
        %496 = vperm.xlu0 %495, %v464
        %v497 = vpop.permute.xlu0 %496
        %500 = vset.pattern.permute.xlu0 0
        %501 = vperm.xlu0 %500, %v465
        %v502 = vpop.permute.xlu0 %501
        %v506 = vunpack.c.l.b16 %v462
        %v507 = vunpack.c.l.b16 %v463
        %v508 = vpack.c.b16 %v507, %v506
        %vm509 = vcmask 261120
        %v511 = vsel %vm509, %v508, 0
        %513 = vmatprep.subr.bf16.mxu0 0
        %514 = vmatpush1.bf16.msra.mxu0 %v487
        %515 = vmatprep.subr.bf16.mxu0 0
        %516 = vmatpush1.bf16.msra.mxu0 %v492
        %517 = vmatprep.subr.bf16.mxu0 0
        %518 = vmatpush1.bf16.msra.mxu0 0
        %519 = vmatprep.subr.bf16.mxu0 0
        %520 = vmatpush1.bf16.msra.mxu0 0
        %521 = vmatprep.subr.bf16.mxu0 0
        %522 = vmatpush1.bf16.msra.mxu0 0
        %523 = vmatprep.subr.bf16.mxu0 0
        %524 = vmatpush1.bf16.msra.mxu0 0
        %525 = vmatprep.subr.bf16.mxu0 0
        %526 = vmatpush1.bf16.msra.mxu0 0
        %527 = vmatprep.subr.bf16.mxu0 0
        %528 = vmatpush1.bf16.msra.mxu0 0
        %529 = vmatprep.subr.bf16.mxu0 0
        %530 = vmatpush1.bf16.msra.mxu0 0
        %531 = vmatprep.subr.bf16.mxu0 0
        %532 = vmatpush1.bf16.msra.mxu0 0
        %533 = vmatprep.subr.bf16.mxu0 0
        %534 = vmatpush1.bf16.msra.mxu0 0
        %535 = vmatprep.subr.bf16.mxu0 0
        %536 = vmatpush1.bf16.msra.mxu0 0
        %537 = vmatprep.subr.bf16.mxu0 0
        %538 = vmatpush1.bf16.msra.mxu0 0
        %539 = vmatprep.subr.bf16.mxu0 0
        %540 = vmatpush1.bf16.msra.mxu0 0
        %541 = vmatprep.subr.bf16.mxu0 0
        %542 = vmatpush1.bf16.msra.mxu0 0
        %543 = vmatprep.subr.bf16.mxu0 0
        %544 = vmatpush1.bf16.msra.mxu0 0
        %545 = vmatprep.mubr.bf16.mxu0 0
        %546 = vmatmul.mubr.bf16.gmra.mrb[0].mxu0 %v511
        %v547 = vpop.f32.mrb[0].mxu0
        %v548 = vadd.f32 %v497, %v547
        %v549 = vpop.f32.mrb[0].mxu0
        %v550 = vpop.f32.mrb[0].mxu0
        %v551 = vadd.f32 %v502, %v550
        %v552 = vpop.f32.mrb[0].mxu0
        %553 = vdwg.mxu0
        %v554 = vmax.f32 %v548, 0.0
        %v555 = vmax.f32 %v551, 0.0
        %556 = vrot.lane.b32.xlu0 %v554, 1
        %v557 = vpop.permute.xlu0 %556
        %558 = vrot.lane.b32.xlu0 %v555, 1
        %v559 = vpop.permute.xlu0 %558
        %v560 = vpack.c.bf16 %v559, %v557
        %v561 = vmul.bf16 %v560, %v486
        %v562 = vpack.c.bf16 %v555, %v554
        %564 = vset.pattern.permute.xlu0 0
        %565 = vperm.xlu0 %564, %v468
        %v566 = vpop.permute.xlu0 %565
        %569 = vset.pattern.permute.xlu0 0
        %570 = vperm.xlu0 %569, %v469
        %v571 = vpop.permute.xlu0 %570
        %v575 = vunpack.c.l.b16 %v466
        %v576 = vunpack.c.l.b16 %v467
        %v577 = vpack.c.b16 %v576, %v575
        %v579 = vsel %vm509, %v577, 0
        %581 = vmatprep.subr.bf16.mxu0 0
        %582 = vmatpush1.bf16.msra.mxu0 %v561
        %583 = vmatprep.subr.bf16.mxu0 0
        %584 = vmatpush1.bf16.msra.mxu0 %v562
        %585 = vmatprep.subr.bf16.mxu0 0
        %586 = vmatpush1.bf16.msra.mxu0 0
        %587 = vmatprep.subr.bf16.mxu0 0
        %588 = vmatpush1.bf16.msra.mxu0 0
        %589 = vmatprep.subr.bf16.mxu0 0
        %590 = vmatpush1.bf16.msra.mxu0 0
        %591 = vmatprep.subr.bf16.mxu0 0
        %592 = vmatpush1.bf16.msra.mxu0 0
        %593 = vmatprep.subr.bf16.mxu0 0
        %594 = vmatpush1.bf16.msra.mxu0 0
        %595 = vmatprep.subr.bf16.mxu0 0
        %596 = vmatpush1.bf16.msra.mxu0 0
        %597 = vmatprep.subr.bf16.mxu0 0
        %598 = vmatpush1.bf16.msra.mxu0 0
        %599 = vmatprep.subr.bf16.mxu0 0
        %600 = vmatpush1.bf16.msra.mxu0 0
        %601 = vmatprep.subr.bf16.mxu0 0
        %602 = vmatpush1.bf16.msra.mxu0 0
        %603 = vmatprep.subr.bf16.mxu0 0
        %604 = vmatpush1.bf16.msra.mxu0 0
        %605 = vmatprep.subr.bf16.mxu0 0
        %606 = vmatpush1.bf16.msra.mxu0 0
        %607 = vmatprep.subr.bf16.mxu0 0
        %608 = vmatpush1.bf16.msra.mxu0 0
        %609 = vmatprep.subr.bf16.mxu0 0
        %610 = vmatpush1.bf16.msra.mxu0 0
        %611 = vmatprep.subr.bf16.mxu0 0
        %612 = vmatpush1.bf16.msra.mxu0 0
        %613 = vmatprep.mubr.bf16.mxu0 0
        %614 = vmatmul.mubr.bf16.gmra.mrb[0].mxu0 %v579
        %v615 = vpop.f32.mrb[0].mxu0
        %v616 = vadd.f32 %v566, %v615
        %v617 = vpop.f32.mrb[0].mxu0
        %v618 = vpop.f32.mrb[0].mxu0
        %v619 = vadd.f32 %v571, %v618
        %v620 = vpop.f32.mrb[0].mxu0
        %621 = vdwg.mxu0
        %v622 = vmax.f32 %v616, 0.0
        %v623 = vmax.f32 %v619, 0.0
        %625 = vset.pattern.permute.xlu0 0
        %626 = vperm.xlu0 %625, %v472
        %v627 = vpop.permute.xlu0 %626
        %630 = vset.pattern.permute.xlu0 0
        %631 = vperm.xlu0 %630, %v473
        %v632 = vpop.permute.xlu0 %631
        %v636 = vunpack.c.l.b16 %v470
        %v637 = vunpack.c.l.b16 %v471
        %v638 = vpack.c.b16 %v637, %v636
        %vm639 = vcmask 130048
        %v641 = vsel %vm639, %v638, 0
        %643 = vmatprep.subr.bf16.mxu0 0
        %644 = vmatpush1.bf16.msra.mxu0 %v492
        %645 = vmatprep.subr.bf16.mxu0 0
        %646 = vmatpush1.bf16.msra.mxu0 0
        %647 = vmatprep.subr.bf16.mxu0 0
        %648 = vmatpush1.bf16.msra.mxu0 0
        %649 = vmatprep.subr.bf16.mxu0 0
        %650 = vmatpush1.bf16.msra.mxu0 0
        %651 = vmatprep.subr.bf16.mxu0 0
        %652 = vmatpush1.bf16.msra.mxu0 0
        %653 = vmatprep.subr.bf16.mxu0 0
        %654 = vmatpush1.bf16.msra.mxu0 0
        %655 = vmatprep.subr.bf16.mxu0 0
        %656 = vmatpush1.bf16.msra.mxu0 0
        %657 = vmatprep.subr.bf16.mxu0 0
        %658 = vmatpush1.bf16.msra.mxu0 0
        %659 = vmatprep.subr.bf16.mxu0 0
        %660 = vmatpush1.bf16.msra.mxu0 0
        %661 = vmatprep.subr.bf16.mxu0 0
        %662 = vmatpush1.bf16.msra.mxu0 0
        %663 = vmatprep.subr.bf16.mxu0 0
        %664 = vmatpush1.bf16.msra.mxu0 0
        %665 = vmatprep.subr.bf16.mxu0 0
        %666 = vmatpush1.bf16.msra.mxu0 0
        %667 = vmatprep.subr.bf16.mxu0 0
        %668 = vmatpush1.bf16.msra.mxu0 0
        %669 = vmatprep.subr.bf16.mxu0 0
        %670 = vmatpush1.bf16.msra.mxu0 0
        %671 = vmatprep.subr.bf16.mxu0 0
        %672 = vmatpush1.bf16.msra.mxu0 0
        %673 = vmatprep.subr.bf16.mxu0 0
        %674 = vmatpush1.bf16.msra.mxu0 0
        %675 = vmatprep.mubr.bf16.mxu0 0
        %676 = vmatmul.mubr.bf16.gmra.mrb[0].mxu0 %v641
        %v677 = vpop.f32.mrb[0].mxu0
        %v678 = vadd.f32 %v627, %v677
        %v679 = vpop.f32.mrb[0].mxu0
        %v680 = vpop.f32.mrb[0].mxu0
        %v681 = vadd.f32 %v632, %v680
        %v682 = vpop.f32.mrb[0].mxu0
        %683 = vdwg.mxu0
        %v684 = vadd.f32 %v622, %v678
        %v685 = vadd.f32 %v623, %v681
        %v686 = vmax.f32 %v684, 0.0
        %v687 = vmax.f32 %v685, 0.0
        %v688 = vld [vmem:[%s8] sm:$0xf]
        %v689 = vld [vmem:[%s8 + $0x4] sm:$0xf]
        %v690 = vld [vmem:[%s9] sm:$0xff]
        %v691 = vld [vmem:[%s9 + $0x8] sm:$0xff]
        %v692 = vld [vmem:[%s10] sm:$0xf]
        %v693 = vld [vmem:[%s10 + $0x4] sm:$0xf]
        %v694 = vld [vmem:[%s11] sm:$0xff]
        %v695 = vld [vmem:[%s11 + $0x8] sm:$0xff]
        %696 = vrot.lane.b32.xlu0 %v686, 2
        %v697 = vpop.permute.xlu0 %696
        %698 = vrot.lane.b32.xlu0 %v687, 2
        %v699 = vpop.permute.xlu0 %698
        %v700 = vpack.c.bf16 %v699, %v697
        %v701 = vshrl.u32 %v474, 16
        %v702 = vpack.i.b16 %v701, %v701
        %v704 = vlaneseq
        %v705 = vshrl.u32 %v704, 7
        %v706 = vsub.s32 0, %v705
        %v707 = vrot.slane %v702, %v706
        %v708 = vmul.bf16 %v700, %v707
        %v709 = vpack.c.bf16 %v687, %v686
        %711 = vset.pattern.permute.xlu0 0
        %712 = vperm.xlu0 %711, %v690
        %v713 = vpop.permute.xlu0 %712
        %716 = vset.pattern.permute.xlu0 0
        %717 = vperm.xlu0 %716, %v691
        %v718 = vpop.permute.xlu0 %717
        %v722 = vunpack.c.l.b16 %v688
        %v723 = vunpack.c.l.b16 %v689
        %v724 = vpack.c.b16 %v723, %v722
        %v726 = vsel %vm509, %v724, 0
        %728 = vmatprep.subr.bf16.mxu0 0
        %729 = vmatpush1.bf16.msra.mxu0 %v708
        %730 = vmatprep.subr.bf16.mxu0 0
        %731 = vmatpush1.bf16.msra.mxu0 %v709
        %732 = vmatprep.subr.bf16.mxu0 0
        %733 = vmatpush1.bf16.msra.mxu0 0
        %734 = vmatprep.subr.bf16.mxu0 0
        %735 = vmatpush1.bf16.msra.mxu0 0
        %736 = vmatprep.subr.bf16.mxu0 0
        %737 = vmatpush1.bf16.msra.mxu0 0
        %738 = vmatprep.subr.bf16.mxu0 0
        %739 = vmatpush1.bf16.msra.mxu0 0
        %740 = vmatprep.subr.bf16.mxu0 0
        %741 = vmatpush1.bf16.msra.mxu0 0
        %742 = vmatprep.subr.bf16.mxu0 0
        %743 = vmatpush1.bf16.msra.mxu0 0
        %744 = vmatprep.subr.bf16.mxu0 0
        %745 = vmatpush1.bf16.msra.mxu0 0
        %746 = vmatprep.subr.bf16.mxu0 0
        %747 = vmatpush1.bf16.msra.mxu0 0
        %748 = vmatprep.subr.bf16.mxu0 0
        %749 = vmatpush1.bf16.msra.mxu0 0
        %750 = vmatprep.subr.bf16.mxu0 0
        %751 = vmatpush1.bf16.msra.mxu0 0
        %752 = vmatprep.subr.bf16.mxu0 0
        %753 = vmatpush1.bf16.msra.mxu0 0
        %754 = vmatprep.subr.bf16.mxu0 0
        %755 = vmatpush1.bf16.msra.mxu0 0
        %756 = vmatprep.subr.bf16.mxu0 0
        %757 = vmatpush1.bf16.msra.mxu0 0
        %758 = vmatprep.subr.bf16.mxu0 0
        %759 = vmatpush1.bf16.msra.mxu0 0
        %760 = vmatprep.mubr.bf16.mxu0 0
        %761 = vmatmul.mubr.bf16.gmra.mrb[0].mxu0 %v726
        %v762 = vpop.f32.mrb[0].mxu0
        %v763 = vadd.f32 %v713, %v762
        %v764 = vpop.f32.mrb[0].mxu0
        %v765 = vpop.f32.mrb[0].mxu0
        %v766 = vadd.f32 %v718, %v765
        %v767 = vpop.f32.mrb[0].mxu0
        %768 = vdwg.mxu0
        %v769 = vmax.f32 %v763, 0.0
        %v770 = vmax.f32 %v766, 0.0
        %771 = vrot.lane.b32.xlu0 %v769, 2
        %v772 = vpop.permute.xlu0 %771
        %773 = vrot.lane.b32.xlu0 %v770, 2
        %v774 = vpop.permute.xlu0 %773
        %v775 = vpack.c.bf16 %v774, %v772
        %v776 = vmul.bf16 %v775, %v707
        %v777 = vpack.c.bf16 %v770, %v769
        %779 = vset.pattern.permute.xlu0 0
        %780 = vperm.xlu0 %779, %v694
        %v781 = vpop.permute.xlu0 %780
        %784 = vset.pattern.permute.xlu0 0
        %785 = vperm.xlu0 %784, %v695
        %v786 = vpop.permute.xlu0 %785
        %v790 = vunpack.c.l.b16 %v692
        %v791 = vunpack.c.l.b16 %v693
        %v792 = vpack.c.b16 %v791, %v790
        %v794 = vsel %vm509, %v792, 0
        %796 = vmatprep.subr.bf16.mxu0 0
        %797 = vmatpush1.bf16.msra.mxu0 %v776
        %798 = vmatprep.subr.bf16.mxu0 0
        %799 = vmatpush1.bf16.msra.mxu0 %v777
        %800 = vmatprep.subr.bf16.mxu0 0
        %801 = vmatpush1.bf16.msra.mxu0 0
        %802 = vmatprep.subr.bf16.mxu0 0
        %803 = vmatpush1.bf16.msra.mxu0 0
        %804 = vmatprep.subr.bf16.mxu0 0
        %805 = vmatpush1.bf16.msra.mxu0 0
        %806 = vmatprep.subr.bf16.mxu0 0
        %807 = vmatpush1.bf16.msra.mxu0 0
        %808 = vmatprep.subr.bf16.mxu0 0
        %809 = vmatpush1.bf16.msra.mxu0 0
        %810 = vmatprep.subr.bf16.mxu0 0
        %811 = vmatpush1.bf16.msra.mxu0 0
        %812 = vmatprep.subr.bf16.mxu0 0
        %813 = vmatpush1.bf16.msra.mxu0 0
        %814 = vmatprep.subr.bf16.mxu0 0
        %815 = vmatpush1.bf16.msra.mxu0 0
        %816 = vmatprep.subr.bf16.mxu0 0
        %817 = vmatpush1.bf16.msra.mxu0 0
        %818 = vmatprep.subr.bf16.mxu0 0
        %819 = vmatpush1.bf16.msra.mxu0 0
        %820 = vmatprep.subr.bf16.mxu0 0
        %821 = vmatpush1.bf16.msra.mxu0 0
        %822 = vmatprep.subr.bf16.mxu0 0
        %823 = vmatpush1.bf16.msra.mxu0 0
        %824 = vmatprep.subr.bf16.mxu0 0
        %825 = vmatpush1.bf16.msra.mxu0 0
        %826 = vmatprep.subr.bf16.mxu0 0
        %827 = vmatpush1.bf16.msra.mxu0 0
        %828 = vmatprep.mubr.bf16.mxu0 0
        %829 = vmatmul.mubr.bf16.gmra.mrb[0].mxu0 %v794
        %v830 = vpop.f32.mrb[0].mxu0
        %v831 = vadd.f32 %v781, %v830
        %v832 = vpop.f32.mrb[0].mxu0
        %v833 = vpop.f32.mrb[0].mxu0
        %v834 = vadd.f32 %v786, %v833
        %v835 = vpop.f32.mrb[0].mxu0
        %836 = vdwg.mxu0
        %v837 = vmax.f32 %v831, 0.0
        %v838 = vmax.f32 %v834, 0.0
        %v839 = vadd.f32 %v837, %v686
        %v840 = vadd.f32 %v838, %v687
        %v841 = vmax.f32 %v839, 0.0
        %v842 = vmax.f32 %v840, 0.0
        %v843 = vpack.c.bf16 %v842, %v841
        %v845 = vunpack.c.l.b16 %v843
        %v846 = vunpack.c.h.b16 %v843
        %v847 = vpack.c.b16 %v845, %v845
        %v848 = vpack.c.b16 %v846, %v846
        %851 = vst [vmem:[%s456] sm:$0xf] %v847
        %852 = vst [vmem:[%s456 + $0x4] sm:$0xf] %v848
        %s853 = sand.u32 %s291, 1
        %s854 = scalar_lea.sflag [#allocation4], %s853
        %s855 = sand.u32 %s291, 1
        %s856 = smul.addr %s855, 8
        %s857 = scalar_lea.vmem [#allocation3], %s856
        // Predicated region
        $region110: #{tpu_custom_call.1} parent=104 // pred_check
          %p858 = pneg %p301
        $region111: #{tpu_custom_call.1} parent=104 // pred_check_branch
          %860 = sbr.rel (%p858) target = $region113
        $region112: #{tpu_custom_call.1} parent=104 // pred_region
          %s862 = ssub.s32 128, 128
          %863 = vsyncadd %s854, %s862
          %s864 = smul.addr %s26, 64
          %s865 = scalar_lea.hbm %s12, %s864
          %s866 = sshll.u32 %s857, 4
          %s867 = int_to_ptr.vmem [resolvable:$true] %s866
          %872 = dma.vmem_to_hbm [thread:$0]  %s867, 128, %s865, %s854, 64, 128, 4
        $region113: #{tpu_custom_call.1} parent=104 // pred_fallthru
          _
      $region105: #{tpu_custom_call.1} parent=5 // pred_fallthru
        _
      %p873 = scmp.le.s32.totalorder 2, %s21
      // Predicated region
      $region114: #{tpu_custom_call.1} parent=5 // pred_check
        %p874 = pneg %p873
      $region115: #{tpu_custom_call.1} parent=5 // pred_check_branch
        %876 = sbr.rel (%p874) target = $region117
      $region116: #{tpu_custom_call.1} parent=5 // pred_region
        %s877 = ssub.s32 %s21, 2
        // Predicated region
        $region118: #{tpu_custom_call.1} parent=116 // pred_check
          %p878 = pneg %p307
        $region119: #{tpu_custom_call.1} parent=116 // pred_check_branch
          %880 = sbr.rel (%p878) target = $region121
        $region120: #{tpu_custom_call.1} parent=116 // pred_region
          %s881 = sand.u32 %s292, 1
          %s882 = scalar_lea.sflag [#allocation4], %s881
          %s883 = sand.u32 %s292, 1
          %s884 = smul.addr %s883, 8
          %s885 = scalar_lea.vmem [#allocation3], %s884
          %886 = dma.done %s882, 128
        $region121: #{tpu_custom_call.1} parent=116 // pred_fallthru
          _
      $region117: #{tpu_custom_call.1} parent=5 // pred_fallthru
        _
    $region6: #{tpu_custom_call.1} parent=1 // loop_footer
      %s25 = sadd.s32 1, %s21
    $region7: #{tpu_custom_call.1} parent=1 // loop_footer_branch
      %20 = sbr.rel target = $region3
    $region8: #{tpu_custom_call.1} parent=1 // loop_exit
      _
    %887 = vsyncpa [#allocation4], 1
    %s888 = scalar_lea.sflag [#allocation4], 1
    %889 = vsyncpa %s888, 1

</llo_original>
